<compile_context>
chip_gen: v5e
topology: v5e:2x2
jax: 0.10.0
libtpu: 0.0.40
codegen_flags: <defaults>
</compile_context>

<pallas_src>
import functools

import jax
import jax.numpy as jnp
from jax import lax
from jax.experimental import pallas as pl
from jax.experimental.pallas import tpu as pltpu


def _mla_kernel(x_ref, a_ref, o_ref, s_ref, *maybe_acc, mxu_dtype, approx_recip):
    # x_ref:   (TB, TS, D)  current batch/sequence tile
    # a_ref:   (D, TL)      label-attention tile (resident across seq steps)
    # o_ref:   (TB, TL, D)  output tile (resident across seq steps)
    # s_ref:   (TB, 1, TL)  f32 running softmax denominators
    # maybe_acc: optional (TB, TL, D) f32 scratch (only for non-f32 outputs)
    acc_ref = maybe_acc[0] if maybe_acc else o_ref
    si = pl.program_id(2)

    @pl.when(si == 0)
    def _init():
        s_ref[...] = jnp.zeros_like(s_ref)
        acc_ref[...] = jnp.zeros_like(acc_ref)

    x = x_ref[...]                               # (TB, TS, D)
    a = a_ref[...]                               # (D, TL)
    TB, TS, D = x_ref.shape

    xm = x.astype(mxu_dtype)
    am = a.astype(mxu_dtype)

    # scores = tanh(x @ A): one large (TB*TS, D) x (D, TL) MXU op, f32 accum.
    scores = jnp.tanh(
        jnp.dot(xm.reshape(TB * TS, D), am,
                preferred_element_type=jnp.float32)
    ).reshape(TB, TS, -1)                        # (TB, TS, TL)

    # tanh bounds scores to [-1, 1] => exp in [1/e, e]; no max subtraction or
    # rescaling needed -- streaming sums are exact softmax math.
    e = jnp.exp(scores)                          # (TB, TS, TL) f32
    em = e.astype(mxu_dtype)
    # Denominator from the SAME cast values used in the numerator matmul.
    s_ref[...] += jnp.sum(em.astype(jnp.float32), axis=1, keepdims=True)

    # Unnormalized output: contract the sequence axis directly (no w.T).
    acc_ref[...] += lax.dot_general(
        em, xm,
        (((1,), (1,)), ((0,), (0,))),            # contract TS, batch TB
        preferred_element_type=jnp.float32)      # (TB, TL, D)

    @pl.when(si == pl.num_programs(2) - 1)
    def _finalize():
        s = s_ref[...]                           # (TB, 1, TL)
        if approx_recip:
            inv = pl.reciprocal(s, approx=True)  # EUP slot, ~free
        else:
            inv = 1.0 / s                        # exact path
        o_ref[...] = (acc_ref[...] * jnp.swapaxes(inv, 1, 2)).astype(o_ref.dtype)


def _tpu_vmem_and_cores():
    """Trace-time hardware query with conservative fallbacks (64 MiB, 1 core)."""
    vmem = 64 * 1024 * 1024
    cores = 1
    try:
        info = pltpu.get_tpu_info()
        for name in ("vmem_capacity_bytes", "vmem_bytes", "vmem_size_bytes"):
            v = getattr(info, name, None)
            if v:
                vmem = int(v)
                break
        for name in ("num_tensorcores", "tensorcores_per_chip",
                     "num_cores", "cores_per_chip"):
            v = getattr(info, name, None)
            if v:
                cores = int(v)
                break
    except Exception:
        pass
    return vmem, cores


def _choose_tiles(B, S, D, Lp, x_itemsize, a_itemsize, out_itemsize,
                  out_is_f32, budget, num_cores):
    """VMEM-accurate (double-buffered) tile selection for (batch, label, seq)."""
    sub = {4: 8, 2: 16, 1: 32}.get(x_itemsize, 8)   # sublane packing of x dtype

    def footprint(tb, ts, tl, x_bufs=2):
        f = x_bufs * tb * ts * D * x_itemsize        # pipelined x tiles
        f += 2 * D * tl * a_itemsize                 # A buffers (seq-resident)
        f += 2 * tb * tl * D * out_itemsize          # output block buffers
        f += tb * 8 * max(tl, 128) * 4               # padded denominator scratch
        if not out_is_f32:
            f += tb * tl * D * 4                     # f32 accumulator scratch
        return f

    # Label tile: keep all labels resident when possible; otherwise the
    # largest 128-lane-multiple divisor of Lp that fits (bites v7x first).
    min_ts = min(S, sub)
    tl = Lp
    if footprint(1, min_ts, Lp) > budget and Lp % 128 == 0:
        tl = 128
        for cand in range(Lp - 128, 127, -128):
            if Lp % cand == 0 and footprint(1, min_ts, cand) <= budget:
                tl = cand
                break

    # Sequence tile: largest sublane-aligned divisor of S that fits
    # (prefer full S -> fewest grid steps / least per-step DMA fixed cost).
    divs = [t for t in range(1, S + 1) if S % t == 0]
    cands = ([t for t in divs if t % sub == 0]
             or [t for t in divs if t % 8 == 0])
    cands = sorted(set(cands) | {S}, reverse=True)
    ts = next((t for t in cands if footprint(1, t, tl) <= budget), cands[-1])

    # Batch tile: largest divisor of B that fits; on multi-TensorCore parts
    # keep >= 2 parallel grid steps unless the label axis already supplies them.
    tb_cap = B
    if num_cores >= 2 and B >= 2 and (Lp // tl) < num_cores:
        tb_cap = max(1, B // 2)
    bdivs = sorted([t for t in range(1, B + 1) if B % t == 0], reverse=True)
    tb = next((t for t in bdivs
               if t <= tb_cap and footprint(t, ts, tl) <= budget), 1)

    # Extra x pipelining for HBM-bound (small-L) shapes when VMEM allows and
    # there are enough grid steps for it to matter.
    steps = (B // tb) * (Lp // tl) * (S // ts)
    x_bufs = 3 if (Lp <= 256 and steps > 2
                   and footprint(tb, ts, tl, x_bufs=3) <= budget) else 2

    return tb, ts, tl, x_bufs, footprint(tb, ts, tl, x_bufs)


def multi_label_attention(x, A, *, use_bf16_mxu=False,
                          batch_tile=None, seq_tile=None, label_tile=None):
    B, S, D = x.shape
    D2, L = A.shape
    assert D == D2, "A must have shape (D_in, num_labels)"

    out_dtype = x.dtype
    out_is_f32 = (out_dtype == jnp.float32)
    mxu_dtype = (jnp.bfloat16 if (use_bf16_mxu or x.dtype == jnp.bfloat16)
                 else x.dtype)

    # Lane-dense label padding (unmasked stores, full MXU columns) when the
    # extra padded-label compute is bounded (< 2x).
    Lp = L
    if L % 128 != 0 and L > 64:
        Lp = ((L + 127) // 128) * 128
        A = jnp.pad(A, ((0, 0), (0, Lp - L)))

    vmem_cap, num_cores = _tpu_vmem_and_cores()
    budget = min(vmem_cap // 2, 64 * 1024 * 1024)
    tb, ts, tl, x_bufs, fp = _choose_tiles(
        B, S, D, Lp, x.dtype.itemsize, A.dtype.itemsize,
        jnp.dtype(out_dtype).itemsize, out_is_f32, budget, num_cores)
    if batch_tile is not None:
        tb = batch_tile
    if seq_tile is not None:
        ts = seq_tile
    if label_tile is not None:
        tl = label_tile
    assert B % tb == 0 and S % ts == 0 and Lp % tl == 0
    assert ts == S or ts % 8 == 0
    assert tl == Lp or tl % 128 == 0

    grid = (B // tb, Lp // tl, S // ts)

    def _x_index(bi, li, si):
        return (bi, si, 0)

    if x_bufs != 2:
        try:
            x_spec = pl.BlockSpec((tb, ts, D), _x_index,
                                  pipeline_mode=pl.Buffered(x_bufs))
        except (TypeError, AttributeError):
            x_spec = pl.BlockSpec((tb, ts, D), _x_index)
    else:
        x_spec = pl.BlockSpec((tb, ts, D), _x_index)

    scratch = [pltpu.VMEM((tb, 1, tl), jnp.float32)]          # softmax denoms
    if not out_is_f32:
        scratch.append(pltpu.VMEM((tb, tl, D), jnp.float32))  # unnormalized out

    vmem_limit = int(min(max(32 * 1024 * 1024, fp + 8 * 1024 * 1024), vmem_cap))

    kernel = functools.partial(
        _mla_kernel,
        mxu_dtype=mxu_dtype,
        approx_recip=(mxu_dtype == jnp.bfloat16),
    )

    out = pl.pallas_call(
        kernel,
        out_shape=jax.ShapeDtypeStruct((B, Lp, D), out_dtype),
        grid_spec=pltpu.PrefetchScalarGridSpec(
            num_scalar_prefetch=0,
            grid=grid,
            in_specs=[
                x_spec,
                pl.BlockSpec((D, tl), lambda bi, li, si: (0, li)),  # resident
            ],
            out_specs=pl.BlockSpec((tb, tl, D), lambda bi, li, si: (bi, li, 0)),
            scratch_shapes=scratch,
        ),
        compiler_params=pltpu.CompilerParams(
            dimension_semantics=("parallel", "parallel", "arbitrary"),
            vmem_limit_bytes=vmem_limit,
        ),
    )(x, A)

    if Lp != L:
        out = out[:, :L, :]
    return out


def multi_label_attention_ref(x, A):
    scores = jnp.tanh(jnp.einsum("bsd,dl->bsl", x, A))
    w = jax.nn.softmax(scores, axis=1)
    return jnp.einsum("bsl,bsd->bld", w, x)


if __name__ == "__main__":
    key = jax.random.PRNGKey(0)
    kx, ka = jax.random.split(key)

    B, S, D_in, num_labels = 2, 8, 32, 16

    x = jax.random.normal(kx, (B, S, D_in), dtype=jnp.float32)
    # torch.nn.init.uniform_(A, -0.1, 0.1) equivalent, deterministic.
    A = jax.random.uniform(ka, (D_in, num_labels), dtype=jnp.float32,
                           minval=-0.1, maxval=0.1)

    ref = multi_label_attention_ref(x, A)

    # Exact f32 MXU path.
    out = multi_label_attention(x, A)
    jax.block_until_ready(out)
    assert out.shape == (B, num_labels, D_in)
    assert jnp.allclose(out, ref, atol=2e-5, rtol=2e-5)

    # Fast bf16-MXU path (opt-in), looser tolerance.
    out_fast = multi_label_attention(x, A, use_bf16_mxu=True)
    jax.block_until_ready(out_fast)
    assert out_fast.shape == (B, num_labels, D_in)
    assert jnp.allclose(out_fast, ref, atol=5e-2, rtol=5e-2)

    print("KERNEL_OK")
</pallas_src>

<mosaic_0001>
module attributes {stable_mosaic.version = 11 : i64} {
  func.func @_mla_kernel(%arg0: i32, %arg1: i32, %arg2: i32, %arg3: memref<2x8x32xf32, #tpu.memory_space<vmem>>, %arg4: memref<32x16xf32, #tpu.memory_space<vmem>>, %arg5: memref<2x16x32xf32, #tpu.memory_space<vmem>>, %arg6: memref<2x1x16xf32, #tpu.memory_space<vmem>>) attributes {dimension_semantics = [#tpu.dimension_semantics<parallel>, #tpu.dimension_semantics<parallel>, #tpu.dimension_semantics<arbitrary>], iteration_bounds = array<i64: 1, 1, 1>, scalar_prefetch = 0 : i64, scratch_operands = 1 : i64, tpu.core_type = #tpu.core_type<tc>, window_params = [{transform_indices = @transform_0, window_bounds = array<i64: 2, 8, 32>}, {transform_indices = @transform_1, window_bounds = array<i64: 32, 16>}, {transform_indices = @transform_2, window_bounds = array<i64: 2, 16, 32>}]} {
    %c0_i32 = arith.constant 0 : i32
    %0 = arith.cmpi eq, %arg2, %c0_i32 : i32
    %1 = arith.extui %0 : i1 to i32
    %c0_i32_0 = arith.constant 0 : i32
    %2 = arith.cmpi ne, %1, %c0_i32_0 : i32
    scf.if %2 {
      %cst_21 = arith.constant 0.000000e+00 : f32
      %22 = vector.broadcast %cst_21 : f32 to vector<2x1x16xf32>
      %c0_22 = arith.constant 0 : index
      %c0_23 = arith.constant 0 : index
      %c0_24 = arith.constant 0 : index
      %23 = vector.load %arg6[%c0_22, %c0_23, %c0_24] : memref<2x1x16xf32, #tpu.memory_space<vmem>>, vector<2x1x16xf32>
      tpu.vector_store %arg6[%c0_22, %c0_23, %c0_24], %22 {strides = array<i32>} : memref<2x1x16xf32, #tpu.memory_space<vmem>>, vector<2x1x16xf32>,
      %cst_25 = arith.constant 0.000000e+00 : f32
      %24 = vector.broadcast %cst_25 : f32 to vector<2x16x32xf32>
      %c0_26 = arith.constant 0 : index
      %c0_27 = arith.constant 0 : index
      %c0_28 = arith.constant 0 : index
      %25 = vector.load %arg5[%c0_26, %c0_27, %c0_28] : memref<2x16x32xf32, #tpu.memory_space<vmem>>, vector<2x16x32xf32>
      tpu.vector_store %arg5[%c0_26, %c0_27, %c0_28], %24 {strides = array<i32>} : memref<2x16x32xf32, #tpu.memory_space<vmem>>, vector<2x16x32xf32>,
    } else {
    }
    %c0 = arith.constant 0 : index
    %c0_1 = arith.constant 0 : index
    %c0_2 = arith.constant 0 : index
    %3 = vector.load %arg3[%c0, %c0_1, %c0_2] : memref<2x8x32xf32, #tpu.memory_space<vmem>>, vector<2x8x32xf32>
    %c0_3 = arith.constant 0 : index
    %c0_4 = arith.constant 0 : index
    %4 = vector.load %arg4[%c0_3, %c0_4] : memref<32x16xf32, #tpu.memory_space<vmem>>, vector<32x16xf32>
    %5 = vector.shape_cast %3 : vector<2x8x32xf32> to vector<16x32xf32>
    %cst = arith.constant dense<0.000000e+00> : vector<16x16xf32>
    %6 = tpu.matmul %5, %4, %cst {dimension_numbers = #tpu.dot_dimension_numbers<[1], [0], [0], [1], [0, 0, 1, 1], [], []>} : vector<16x32xf32>, vector<32x16xf32>, vector<16x16xf32> -> vector<16x16xf32>
    %7 = math.tanh %6 : vector<16x16xf32>
    %8 = vector.shape_cast %7 : vector<16x16xf32> to vector<2x8x16xf32>
    %9 = math.exp %8 : vector<2x8x16xf32>
    %c0_5 = arith.constant 0 : index
    %c0_6 = arith.constant 0 : index
    %c0_7 = arith.constant 0 : index
    %10 = vector.load %arg6[%c0_5, %c0_6, %c0_7] : memref<2x1x16xf32, #tpu.memory_space<vmem>>, vector<2x1x16xf32>
    %cst_8 = arith.constant dense<0.000000e+00> : vector<2x16xf32>
    %11 = vector.multi_reduction <add>, %9, %cst_8 [1] : vector<2x8x16xf32> to vector<2x16xf32>
    %12 = vector.shape_cast %11 : vector<2x16xf32> to vector<2x1x16xf32>
    %13 = arith.addf %10, %12 : vector<2x1x16xf32>
    %c0_9 = arith.constant 0 : index
    %c0_10 = arith.constant 0 : index
    %c0_11 = arith.constant 0 : index
    %14 = vector.load %arg6[%c0_9, %c0_10, %c0_11] : memref<2x1x16xf32, #tpu.memory_space<vmem>>, vector<2x1x16xf32>
    tpu.vector_store %arg6[%c0_9, %c0_10, %c0_11], %13 {strides = array<i32>} : memref<2x1x16xf32, #tpu.memory_space<vmem>>, vector<2x1x16xf32>,
    %c0_12 = arith.constant 0 : index
    %c0_13 = arith.constant 0 : index
    %c0_14 = arith.constant 0 : index
    %15 = vector.load %arg5[%c0_12, %c0_13, %c0_14] : memref<2x16x32xf32, #tpu.memory_space<vmem>>, vector<2x16x32xf32>
    %cst_15 = arith.constant dense<0.000000e+00> : vector<2x16x32xf32>
    %16 = tpu.matmul %9, %3, %cst_15 {dimension_numbers = #tpu.dot_dimension_numbers<[1], [1], [2], [2], [0, 0, 0, 2, 1, 2], [0], [0]>} : vector<2x8x16xf32>, vector<2x8x32xf32>, vector<2x16x32xf32> -> vector<2x16x32xf32>
    %17 = arith.addf %15, %16 : vector<2x16x32xf32>
    %c0_16 = arith.constant 0 : index
    %c0_17 = arith.constant 0 : index
    %c0_18 = arith.constant 0 : index
    %18 = vector.load %arg5[%c0_16, %c0_17, %c0_18] : memref<2x16x32xf32, #tpu.memory_space<vmem>>, vector<2x16x32xf32>
    tpu.vector_store %arg5[%c0_16, %c0_17, %c0_18], %17 {strides = array<i32>} : memref<2x16x32xf32, #tpu.memory_space<vmem>>, vector<2x16x32xf32>,
    %c0_i32_19 = arith.constant 0 : i32
    %19 = arith.cmpi eq, %arg2, %c0_i32_19 : i32
    %20 = arith.extui %19 : i1 to i32
    %c0_i32_20 = arith.constant 0 : i32
    %21 = arith.cmpi ne, %20, %c0_i32_20 : i32
    scf.if %21 {
      %c0_21 = arith.constant 0 : index
      %c0_22 = arith.constant 0 : index
      %c0_23 = arith.constant 0 : index
      %22 = vector.load %arg6[%c0_21, %c0_22, %c0_23] : memref<2x1x16xf32, #tpu.memory_space<vmem>>, vector<2x1x16xf32>
      %cst_24 = arith.constant 1.000000e+00 : f32
      %23 = vector.broadcast %cst_24 : f32 to vector<2x1x16xf32>
      %24 = arith.divf %23, %22 : vector<2x1x16xf32>
      %c0_25 = arith.constant 0 : index
      %c0_26 = arith.constant 0 : index
      %c0_27 = arith.constant 0 : index
      %25 = vector.load %arg5[%c0_25, %c0_26, %c0_27] : memref<2x16x32xf32, #tpu.memory_space<vmem>>, vector<2x16x32xf32>
      %26 = tpu.transpose %24, [0, 2, 1] : vector<2x1x16xf32> -> vector<2x16x1xf32>
      %27 = vector.broadcast %26 : vector<2x16x1xf32> to vector<2x16x32xf32>
      %28 = arith.mulf %25, %27 : vector<2x16x32xf32>
      %c0_28 = arith.constant 0 : index
      %c0_29 = arith.constant 0 : index
      %c0_30 = arith.constant 0 : index
      %29 = vector.load %arg5[%c0_28, %c0_29, %c0_30] : memref<2x16x32xf32, #tpu.memory_space<vmem>>, vector<2x16x32xf32>
      tpu.vector_store %arg5[%c0_28, %c0_29, %c0_30], %28 {strides = array<i32>} : memref<2x16x32xf32, #tpu.memory_space<vmem>>, vector<2x16x32xf32>,
    } else {
    }
    return
  }
  func.func @transform_0(%arg0: i32, %arg1: i32, %arg2: i32) -> (i32, i32, i32) {
    %c0_i32 = arith.constant 0 : i32
    %c0_i32_0 = arith.constant 0 : i32
    return %arg0, %arg2, %c0_i32 : i32, i32, i32
  }
  func.func @transform_1(%arg0: i32, %arg1: i32, %arg2: i32) -> (i32, i32) {
    %c0_i32 = arith.constant 0 : i32
    %c0_i32_0 = arith.constant 0 : i32
    return %c0_i32, %arg1 : i32, i32
  }
  func.func @transform_2(%arg0: i32, %arg1: i32, %arg2: i32) -> (i32, i32, i32) {
    %c0_i32 = arith.constant 0 : i32
    %c0_i32_0 = arith.constant 0 : i32
    return %arg0, %arg1, %c0_i32 : i32, i32, i32
  }
}

</mosaic_0001>

<llo_original>
// kernel: tpu_custom_call.1
$region0: #{tpu_custom_call.1}
  #allocation0 [shape = 'u32[]', space=smem, size = 0x4, offset = 0x4, fixed_abs, tag = 'smem constant byte address 0x4 - core index']
  #allocation1 [shape = 'u32[72,128]{1,0:T(1,128)}', space=vmem, size = 0x9000, scoped, tag = 'internal scratch']
  #allocation2 [shape = 'f32[2,1,16]{2,1,0:T(1,128)}', space=vmem, size = 0x400, scoped, tag = 'scratch operand']
  %s0 = inlined_call_operand.vmem [shape: f32[2,8,32], index: 0, kind: input, shape index: {}]
  %s1 = inlined_call_operand.vmem [shape: f32[32,16], index: 1, kind: input, shape index: {}]
  %s2 = inlined_call_operand.hbm [shape: f32[2,16,32], index: 2, kind: output, shape index: {}]
  %s3 = sld [smem:[#allocation0]]
  $region26: #{tpu_custom_call.1} parent=0
    _
  %s5 = ssub.s32 1, %s3
  %s6 = scalar_select 0, %s5, %s3
  $region1: #{tpu_custom_call.1} parent=0
    #allocation3 [shape = 'u8[16384]{0}', space=vmem, size = 0x4000, scoped, tag = 'output window, operand 0, single buffered']
    #allocation4 [shape = 's32[1]{0}', space=sflag, size = 0x4, scoped, tag = 'scoped memory for tpu_custom_call.1']
    %7 = vsyncpa [#allocation4], 0
    // Predicated region
    $region2: #{tpu_custom_call.1} parent=1 // pred_check
      _
    $region3: #{tpu_custom_call.1} parent=1 // pred_check_branch
      %9 = sbr.rel (0) target = $region5
    $region4: #{tpu_custom_call.1} parent=1 // pred_region
      _
    $region5: #{tpu_custom_call.1} parent=1 // pred_fallthru
      _
    // Predicated region
    $region6: #{tpu_custom_call.1} parent=1 // pred_check
      _
    $region7: #{tpu_custom_call.1} parent=1 // pred_check_branch
      %11 = sbr.rel (0) target = $region9
    $region8: #{tpu_custom_call.1} parent=1 // pred_region
      _
    $region9: #{tpu_custom_call.1} parent=1 // pred_fallthru
      _
    %p12 = scmp.eq.s32.totalorder 0, 0
    // Predicated region
    $region10: #{tpu_custom_call.1} parent=1 // pred_check
      %p13 = pneg %p12
    $region11: #{tpu_custom_call.1} parent=1 // pred_check_branch
      %15 = sbr.rel (%p13) target = $region13
    $region12: #{tpu_custom_call.1} parent=1 // pred_region
      %vm16 = vcmask 122880
      %17 = vst.msk [vmem:[#allocation2] sm:$0x1] %vm16, 0.0
      %18 = vst.msk [vmem:[#allocation2 + $0x1] sm:$0x1] %vm16, 0.0
      %vm19 = vcmask 261120
      %20 = vst.msk [vmem:[#allocation3] sm:$0xff] %vm19, 0.0
      %21 = vst.msk [vmem:[#allocation3 + $0x8] sm:$0xff] %vm19, 0.0
      %22 = vst.msk [vmem:[#allocation3 + $0x10] sm:$0xff] %vm19, 0.0
      %23 = vst.msk [vmem:[#allocation3 + $0x18] sm:$0xff] %vm19, 0.0
    $region13: #{tpu_custom_call.1} parent=1 // pred_fallthru
      _
    %v24 = vld [vmem:[%s0] sm:$0xff]
    %v25 = vld [vmem:[%s0 + $0x8] sm:$0xff]
    %v26 = vld [vmem:[%s1] sm:$0xff]
    %v27 = vld [vmem:[%s1 + $0x8] sm:$0xff]
    %v28 = vld [vmem:[%s1 + $0x10] sm:$0xff]
    %v29 = vld [vmem:[%s1 + $0x18] sm:$0xff]
    %vm30 = vcmask 261120
    %v32 = vsel %vm30, %v24, 0
    %v35 = vsel %vm30, %v25, 0
    %37 = vmatpush.msra.mxu0 0.0
    %38 = vmatpush.msra.mxu0 0.0
    %39 = vmatpush.msra.mxu0 0.0
    %40 = vmatpush.msra.mxu0 0.0
    %41 = vmatpush.msra.mxu0 0.0
    %42 = vmatpush.msra.mxu0 0.0
    %43 = vmatpush.msra.mxu0 0.0
    %44 = vmatpush.msra.mxu0 0.0
    %45 = vmatpush.msra.mxu0 0.0
    %46 = vmatpush.msra.mxu0 0.0
    %47 = vmatpush.msra.mxu0 0.0
    %48 = vmatpush.msra.mxu0 0.0
    %49 = vmatpush.msra.mxu0 %v29
    %50 = vmatpush.msra.mxu0 %v28
    %51 = vmatpush.msra.mxu0 %v27
    %52 = vmatpush.msra.mxu0 %v26
    %53 = vmatmul.f32.gmra.mxu0 %v32
    %v54 = vpop.f32.mrf.mxu0
    %v55 = vadd.f32 0.0, %v54
    %56 = vmatmul.f32.gmra.mxu0 %v35
    %v57 = vpop.f32.mrf.mxu0
    %v58 = vadd.f32 0.0, %v57
    %59 = vdwg.mxu0
    %v60 = vtanh.pop %v55
    %v61 = vtanh.pop %v58
    %v62 = vmul.f32 %v60, 1.442695
    %v63 = vpow.pop %v62
    %v64 = vmul.f32 %v61, 1.442695
    %v65 = vpow.pop %v64
    %v66 = vld [vmem:[#allocation2] sm:$0x1]
    %v67 = vld [vmem:[#allocation2 + $0x1] sm:$0x1]
    %vm68 = vcmask 130048
    %v69 = vsel %vm68, %v63, 0.0
    %v70 = vrot.slane %v69, 4
    %v71 = vadd.f32 %v69, %v70
    %v72 = vrot.slane %v71, 2
    %v73 = vadd.f32 %v71, %v72
    %v74 = vrot.slane %v73, 1
    %v75 = vadd.f32 %v73, %v74
    %v76 = vsel %vm68, %v65, 0.0
    %v77 = vrot.slane %v76, 4
    %v78 = vadd.f32 %v76, %v77
    %v79 = vrot.slane %v78, 2
    %v80 = vadd.f32 %v78, %v79
    %v81 = vrot.slane %v80, 1
    %v82 = vadd.f32 %v80, %v81
    %v83 = vadd.f32 %v66, %v75
    %v84 = vadd.f32 %v67, %v82
    %vm85 = vcmask 122880
    %86 = vst.msk [vmem:[#allocation2] sm:$0x1] %vm85, %v83
    %87 = vst.msk [vmem:[#allocation2 + $0x1] sm:$0x1] %vm85, %v84
    %v88 = vld [vmem:[#allocation3] sm:$0xff]
    %v89 = vld [vmem:[#allocation3 + $0x8] sm:$0xff]
    %v90 = vld [vmem:[#allocation3 + $0x10] sm:$0xff]
    %v91 = vld [vmem:[#allocation3 + $0x18] sm:$0xff]
    %92 = vxpose.xlu0.b32.start [1/16] %v63, 128
    %93 = vxpose.xlu0.b32.cont [2/16] 0.0, 128
    %94 = vxpose.xlu0.b32.cont [3/16] 0.0, 128
    %95 = vxpose.xlu0.b32.cont [4/16] 0.0, 128
    %96 = vxpose.xlu0.b32.cont [5/16] 0.0, 128
    %97 = vxpose.xlu0.b32.cont [6/16] 0.0, 128
    %98 = vxpose.xlu0.b32.cont [7/16] 0.0, 128
    %99 = vxpose.xlu0.b32.cont [8/16] 0.0, 128
    %100 = vxpose.xlu0.b32.cont [9/16] 0.0, 128
    %101 = vxpose.xlu0.b32.cont [10/16] 0.0, 128
    %102 = vxpose.xlu0.b32.cont [11/16] 0.0, 128
    %103 = vxpose.xlu0.b32.cont [12/16] 0.0, 128
    %104 = vxpose.xlu0.b32.cont [13/16] 0.0, 128
    %105 = vxpose.xlu0.b32.cont [14/16] 0.0, 128
    %106 = vxpose.xlu0.b32.cont [15/16] 0.0, 128
    %107 = vxpose.xlu0.b32.end [16/16] 0.0, 128
    %v108 = vpop.trf.xlu0
    %v109 = vpop.trf.xlu0
    %v110 = vpop.trf.xlu0
    %v111 = vpop.trf.xlu0
    %v112 = vpop.trf.xlu0
    %v113 = vpop.trf.xlu0
    %v114 = vpop.trf.xlu0
    %v115 = vpop.trf.xlu0
    %v116 = vpop.trf.xlu0
    %v117 = vpop.trf.xlu0
    %v118 = vpop.trf.xlu0
    %v119 = vpop.trf.xlu0
    %v120 = vpop.trf.xlu0
    %v121 = vpop.trf.xlu0
    %v122 = vpop.trf.xlu0
    %v123 = vpop.trf.xlu0
    %vm124 = vcmask 64512
    %v126 = vsel %vm124, %v108, 0
    %v129 = vsel %vm124, %v109, 0
    %131 = vmatpush.msra.mxu0 0.0
    %132 = vmatpush.msra.mxu0 0.0
    %133 = vmatpush.msra.mxu0 0.0
    %134 = vmatpush.msra.mxu0 0.0
    %135 = vmatpush.msra.mxu0 0.0
    %136 = vmatpush.msra.mxu0 0.0
    %137 = vmatpush.msra.mxu0 0.0
    %138 = vmatpush.msra.mxu0 0.0
    %139 = vmatpush.msra.mxu0 0.0
    %140 = vmatpush.msra.mxu0 0.0
    %141 = vmatpush.msra.mxu0 0.0
    %142 = vmatpush.msra.mxu0 0.0
    %143 = vmatpush.msra.mxu0 0.0
    %144 = vmatpush.msra.mxu0 0.0
    %145 = vmatpush.msra.mxu0 0.0
    %146 = vmatpush.msra.mxu0 %v24
    %147 = vmatmul.f32.gmra.mxu0 %v126
    %v148 = vpop.f32.mrf.mxu0
    %v149 = vadd.f32 0.0, %v148
    %150 = vmatmul.f32.gmra.mxu0 %v129
    %v151 = vpop.f32.mrf.mxu0
    %v152 = vadd.f32 0.0, %v151
    %153 = vdwg.mxu0
    %154 = vxpose.xlu0.b32.start [1/16] %v65, 128
    %155 = vxpose.xlu0.b32.cont [2/16] 0.0, 128
    %156 = vxpose.xlu0.b32.cont [3/16] 0.0, 128
    %157 = vxpose.xlu0.b32.cont [4/16] 0.0, 128
    %158 = vxpose.xlu0.b32.cont [5/16] 0.0, 128
    %159 = vxpose.xlu0.b32.cont [6/16] 0.0, 128
    %160 = vxpose.xlu0.b32.cont [7/16] 0.0, 128
    %161 = vxpose.xlu0.b32.cont [8/16] 0.0, 128
    %162 = vxpose.xlu0.b32.cont [9/16] 0.0, 128
    %163 = vxpose.xlu0.b32.cont [10/16] 0.0, 128
    %164 = vxpose.xlu0.b32.cont [11/16] 0.0, 128
    %165 = vxpose.xlu0.b32.cont [12/16] 0.0, 128
    %166 = vxpose.xlu0.b32.cont [13/16] 0.0, 128
    %167 = vxpose.xlu0.b32.cont [14/16] 0.0, 128
    %168 = vxpose.xlu0.b32.cont [15/16] 0.0, 128
    %169 = vxpose.xlu0.b32.end [16/16] 0.0, 128
    %v170 = vpop.trf.xlu0
    %v171 = vpop.trf.xlu0
    %v172 = vpop.trf.xlu0
    %v173 = vpop.trf.xlu0
    %v174 = vpop.trf.xlu0
    %v175 = vpop.trf.xlu0
    %v176 = vpop.trf.xlu0
    %v177 = vpop.trf.xlu0
    %v178 = vpop.trf.xlu0
    %v179 = vpop.trf.xlu0
    %v180 = vpop.trf.xlu0
    %v181 = vpop.trf.xlu0
    %v182 = vpop.trf.xlu0
    %v183 = vpop.trf.xlu0
    %v184 = vpop.trf.xlu0
    %v185 = vpop.trf.xlu0
    %v187 = vsel %vm124, %v170, 0
    %v190 = vsel %vm124, %v171, 0
    %192 = vmatpush.msra.mxu0 0.0
    %193 = vmatpush.msra.mxu0 0.0
    %194 = vmatpush.msra.mxu0 0.0
    %195 = vmatpush.msra.mxu0 0.0
    %196 = vmatpush.msra.mxu0 0.0
    %197 = vmatpush.msra.mxu0 0.0
    %198 = vmatpush.msra.mxu0 0.0
    %199 = vmatpush.msra.mxu0 0.0
    %200 = vmatpush.msra.mxu0 0.0
    %201 = vmatpush.msra.mxu0 0.0
    %202 = vmatpush.msra.mxu0 0.0
    %203 = vmatpush.msra.mxu0 0.0
    %204 = vmatpush.msra.mxu0 0.0
    %205 = vmatpush.msra.mxu0 0.0
    %206 = vmatpush.msra.mxu0 0.0
    %207 = vmatpush.msra.mxu0 %v25
    %208 = vmatmul.f32.gmra.mxu0 %v187
    %v209 = vpop.f32.mrf.mxu0
    %v210 = vadd.f32 0.0, %v209
    %211 = vmatmul.f32.gmra.mxu0 %v190
    %v212 = vpop.f32.mrf.mxu0
    %v213 = vadd.f32 0.0, %v212
    %214 = vdwg.mxu0
    %v215 = vadd.f32 %v88, %v149
    %v216 = vadd.f32 %v89, %v152
    %v217 = vadd.f32 %v90, %v210
    %v218 = vadd.f32 %v91, %v213
    %219 = vst.msk [vmem:[#allocation3] sm:$0xff] %vm30, %v215
    %220 = vst.msk [vmem:[#allocation3 + $0x8] sm:$0xff] %vm30, %v216
    %221 = vst.msk [vmem:[#allocation3 + $0x10] sm:$0xff] %vm30, %v217
    %222 = vst.msk [vmem:[#allocation3 + $0x18] sm:$0xff] %vm30, %v218
    // Predicated region
    $region14: #{tpu_custom_call.1} parent=1 // pred_check
      %p223 = pneg %p12
    $region15: #{tpu_custom_call.1} parent=1 // pred_check_branch
      %225 = sbr.rel (%p223) target = $region17
    $region16: #{tpu_custom_call.1} parent=1 // pred_region
      %v226 = vld [vmem:[#allocation2] sm:$0x1]
      %v227 = vld [vmem:[#allocation2 + $0x1] sm:$0x1]
      %v228 = vrcp.pop %v226
      %v229 = vmul.f32 %v226, %v228
      %v230 = vsub.f32 1.0, %v229
      %v231 = vmul.f32 %v228, %v230
      %v232 = vadd.f32 %v228, %v231
      %vm233 = vweird.f32 %v226
      %vm234 = vweird.f32 %v228
      %vm235 = vmor %vm233, %vm234
      %v236 = vsel %vm235, %v228, %v232
      %v237 = vand.u32 2147483647, %v226
      %vm238 = vcmp.eq.f32.partialorder %v237, 8.507059e+37
      %v239 = vand.u32 %v226, 2147483648
      %v240 = vor.u32 1.1754944e-38, %v239
      %v241 = vsel %vm238, %v240, %v236
      %v242 = vmul.f32 1.0, %v241
      %v243 = vrcp.pop %v227
      %v244 = vmul.f32 %v227, %v243
      %v245 = vsub.f32 1.0, %v244
      %v246 = vmul.f32 %v243, %v245
      %v247 = vadd.f32 %v243, %v246
      %vm248 = vweird.f32 %v227
      %vm249 = vweird.f32 %v243
      %vm250 = vmor %vm248, %vm249
      %v251 = vsel %vm250, %v243, %v247
      %v252 = vand.u32 2147483647, %v227
      %vm253 = vcmp.eq.f32.partialorder %v252, 8.507059e+37
      %v254 = vand.u32 %v227, 2147483648
      %v255 = vor.u32 1.1754944e-38, %v254
      %v256 = vsel %vm253, %v255, %v251
      %v257 = vmul.f32 1.0, %v256
      %v258 = vld [vmem:[#allocation3] sm:$0xff]
      %v259 = vld [vmem:[#allocation3 + $0x8] sm:$0xff]
      %v260 = vld [vmem:[#allocation3 + $0x10] sm:$0xff]
      %v261 = vld [vmem:[#allocation3 + $0x18] sm:$0xff]
      %262 = vxpose.xlu0.b32.start [1/16] %v242, 128
      %263 = vxpose.xlu0.b32.cont [2/16] 0.0, 128
      %264 = vxpose.xlu0.b32.cont [3/16] 0.0, 128
      %265 = vxpose.xlu0.b32.cont [4/16] 0.0, 128
      %266 = vxpose.xlu0.b32.cont [5/16] 0.0, 128
      %267 = vxpose.xlu0.b32.cont [6/16] 0.0, 128
      %268 = vxpose.xlu0.b32.cont [7/16] 0.0, 128
      %269 = vxpose.xlu0.b32.cont [8/16] 0.0, 128
      %270 = vxpose.xlu0.b32.cont [9/16] 0.0, 128
      %271 = vxpose.xlu0.b32.cont [10/16] 0.0, 128
      %272 = vxpose.xlu0.b32.cont [11/16] 0.0, 128
      %273 = vxpose.xlu0.b32.cont [12/16] 0.0, 128
      %274 = vxpose.xlu0.b32.cont [13/16] 0.0, 128
      %275 = vxpose.xlu0.b32.cont [14/16] 0.0, 128
      %276 = vxpose.xlu0.b32.cont [15/16] 0.0, 128
      %277 = vxpose.xlu0.b32.end [16/16] 0.0, 128
      %v278 = vpop.trf.xlu0
      %v279 = vpop.trf.xlu0
      %v280 = vpop.trf.xlu0
      %v281 = vpop.trf.xlu0
      %v282 = vpop.trf.xlu0
      %v283 = vpop.trf.xlu0
      %v284 = vpop.trf.xlu0
      %v285 = vpop.trf.xlu0
      %v286 = vpop.trf.xlu0
      %v287 = vpop.trf.xlu0
      %v288 = vpop.trf.xlu0
      %v289 = vpop.trf.xlu0
      %v290 = vpop.trf.xlu0
      %v291 = vpop.trf.xlu0
      %v292 = vpop.trf.xlu0
      %v293 = vpop.trf.xlu0
      %294 = vxpose.xlu0.b32.start [1/16] %v257, 128
      %295 = vxpose.xlu0.b32.cont [2/16] 0.0, 128
      %296 = vxpose.xlu0.b32.cont [3/16] 0.0, 128
      %297 = vxpose.xlu0.b32.cont [4/16] 0.0, 128
      %298 = vxpose.xlu0.b32.cont [5/16] 0.0, 128
      %299 = vxpose.xlu0.b32.cont [6/16] 0.0, 128
      %300 = vxpose.xlu0.b32.cont [7/16] 0.0, 128
      %301 = vxpose.xlu0.b32.cont [8/16] 0.0, 128
      %302 = vxpose.xlu0.b32.cont [9/16] 0.0, 128
      %303 = vxpose.xlu0.b32.cont [10/16] 0.0, 128
      %304 = vxpose.xlu0.b32.cont [11/16] 0.0, 128
      %305 = vxpose.xlu0.b32.cont [12/16] 0.0, 128
      %306 = vxpose.xlu0.b32.cont [13/16] 0.0, 128
      %307 = vxpose.xlu0.b32.cont [14/16] 0.0, 128
      %308 = vxpose.xlu0.b32.cont [15/16] 0.0, 128
      %309 = vxpose.xlu0.b32.end [16/16] 0.0, 128
      %v310 = vpop.trf.xlu0
      %v311 = vpop.trf.xlu0
      %v312 = vpop.trf.xlu0
      %v313 = vpop.trf.xlu0
      %v314 = vpop.trf.xlu0
      %v315 = vpop.trf.xlu0
      %v316 = vpop.trf.xlu0
      %v317 = vpop.trf.xlu0
      %v318 = vpop.trf.xlu0
      %v319 = vpop.trf.xlu0
      %v320 = vpop.trf.xlu0
      %v321 = vpop.trf.xlu0
      %v322 = vpop.trf.xlu0
      %v323 = vpop.trf.xlu0
      %v324 = vpop.trf.xlu0
      %v325 = vpop.trf.xlu0
      %327 = vset.pattern.permute.xlu0 0
      %328 = vperm.xlu0 %327, %v278
      %v329 = vpop.permute.xlu0 %328
      %332 = vset.pattern.permute.xlu0 0
      %333 = vperm.xlu0 %332, %v279
      %v334 = vpop.permute.xlu0 %333
      %337 = vset.pattern.permute.xlu0 0
      %338 = vperm.xlu0 %337, %v310
      %v339 = vpop.permute.xlu0 %338
      %342 = vset.pattern.permute.xlu0 0
      %343 = vperm.xlu0 %342, %v311
      %v344 = vpop.permute.xlu0 %343
      %v346 = vmul.f32 %v258, %v329
      %v347 = vmul.f32 %v259, %v334
      %v348 = vmul.f32 %v260, %v339
      %v349 = vmul.f32 %v261, %v344
      %350 = vst.msk [vmem:[#allocation3] sm:$0xff] %vm30, %v346
      %351 = vst.msk [vmem:[#allocation3 + $0x8] sm:$0xff] %vm30, %v347
      %352 = vst.msk [vmem:[#allocation3 + $0x10] sm:$0xff] %vm30, %v348
      %353 = vst.msk [vmem:[#allocation3 + $0x18] sm:$0xff] %vm30, %v349
    $region17: #{tpu_custom_call.1} parent=1 // pred_fallthru
      _
    // Predicated region
    $region18: #{tpu_custom_call.1} parent=1 // pred_check
      _
    $region19: #{tpu_custom_call.1} parent=1 // pred_check_branch
      %355 = sbr.rel (0) target = $region21
    $region20: #{tpu_custom_call.1} parent=1 // pred_region
      %357 = vsyncadd [#allocation4], 0
      %s358 = sshll.u32 [#allocation3], 4
      %s359 = int_to_ptr.vmem [resolvable:$true] %s358
      %s360 = sshll.u32 %s2, 4
      %s361 = int_to_ptr.hbm [resolvable:$true] %s360
      %366 = dma.vmem_to_hbm [thread:$0]  %s359, 512, %s361, [#allocation4], 128, 128, 8
    $region21: #{tpu_custom_call.1} parent=1 // pred_fallthru
      _
    // Predicated region
    $region22: #{tpu_custom_call.1} parent=1 // pred_check
      _
    $region23: #{tpu_custom_call.1} parent=1 // pred_check_branch
      %368 = sbr.rel (0) target = $region25
    $region24: #{tpu_custom_call.1} parent=1 // pred_region
      %370 = dma.done [#allocation4], 512
    $region25: #{tpu_custom_call.1} parent=1 // pred_fallthru
      _
    %371 = vsyncpa [#allocation4], 1

</llo_original>
